<compile_context>
chip_gen: v6e
topology: v6e:2x2x1
jax: 0.10.0
libtpu: 0.0.40
codegen_flags: <defaults>
</compile_context>

<pallas_src>
import functools

import jax
import jax.numpy as jnp
from jax.experimental import pallas as pl
from jax.experimental.pallas import tpu as pltpu

LANE = 128          # batch tiles live on the 128-lane axis
NEG_BIG = -1e30     # bias for padded action rows -> softmax weight exactly 0


def _round_up(n, m):
    return ((n + m - 1) // m) * m


def _actor_kernel(x_ref, w1_ref, b1_ref, w2_ref, b2_ref, out_ref, *, n_action):
    """One batch-lane tile, transposed (batch-on-lanes) layout.

    x_ref  : [F,  tb]   input features, batch on lanes
    w1_ref : [H8, F ]   fc1 weight^T, zero rows for padded hidden units
    b1_ref : [H8, 1 ]   fc1 bias column (zeros in padded rows)
    w2_ref : [A8, H8]   fc2 weight^T, zero rows for padded actions
    b2_ref : [A8, 1 ]   fc2 bias column, NEG_BIG in padded action rows
    out_ref: [A,  tb]   softmax probabilities (transposed)
    """
    x = x_ref[...]
    # fc1 + relu: [H8, tb]  (MXU: M=H8, K=F, N=tb -> batch rides the lane axis)
    h = jnp.dot(w1_ref[...], x, preferred_element_type=jnp.float32) + b1_ref[...]
    h = jnp.maximum(h, 0.0)
    # fc2: [A8, tb]; padded action rows get NEG_BIG -> exp underflows to 0.
    logits = (jnp.dot(w2_ref[...], h, preferred_element_type=jnp.float32)
              + b2_ref[...])
    # Numerically stable softmax over the (sublane) action axis.  Exact divide
    # keeps each output column summing to 1 at f32 precision.
    m = jnp.max(logits, axis=0, keepdims=True)     # [1, tb]
    e = jnp.exp(logits - m)                        # [A8, tb]
    s = jnp.sum(e, axis=0, keepdims=True)          # [1, tb]
    p = e / s
    out_ref[...] = p[:n_action, :].astype(out_ref.dtype)


def _prep_params(w1, b1, w2, b2):
    """Transpose + pad the parameters for the batch-on-lanes layout."""
    n_features, hidden = w1.shape
    n_action = w2.shape[1]
    h8 = _round_up(hidden, 8)
    a8 = _round_up(n_action, 8)
    w1t = jnp.zeros((h8, n_features), jnp.float32).at[:hidden, :].set(w1.T)
    b1c = jnp.zeros((h8, 1), jnp.float32).at[:hidden, 0].set(b1.reshape(-1))
    w2t = jnp.zeros((a8, h8), jnp.float32).at[:n_action, :hidden].set(w2.T)
    b2c = jnp.full((a8, 1), NEG_BIG, jnp.float32).at[:n_action, 0].set(
        b2.reshape(-1))
    return w1t, b1c, w2t, b2c


def actor_network_forward(x, w1, b1, w2, b2, *, block_b=8192):
    """x: [B, n_features] f32 -> softmax action probabilities [B, n_action]."""
    B, n_features = x.shape
    hidden = w1.shape[1]
    n_action = w2.shape[1]
    h8 = _round_up(hidden, 8)
    a8 = _round_up(n_action, 8)
    w1t, b1c, w2t, b2c = _prep_params(w1, b1, w2, b2)

    # Batch tiling on the lane axis: tb is a multiple of 128.  When more than
    # one grid step is needed, keep the step count even so the "parallel"
    # batch axis balances across both v7x TensorCores.
    steps = pl.cdiv(B, block_b)
    if steps > 1 and steps % 2 == 1:
        steps += 1
    tb = _round_up(pl.cdiv(B, steps), LANE)
    bp = tb * steps

    # Single small wrapper pass: transpose to batch-on-lanes, zero-pad the tail.
    if bp == B:
        xT = x.T
    else:
        xT = jnp.zeros((n_features, bp), x.dtype).at[:, :B].set(x.T)

    param_bytes = 4 * (h8 * n_features + h8 + a8 * h8 + a8)
    cost = pl.CostEstimate(
        flops=2 * bp * (n_features * h8 + h8 * a8),
        transcendentals=a8 * bp,
        bytes_accessed=4 * bp * (n_features + n_action) + param_bytes,
    )

    outT = pl.pallas_call(
        functools.partial(_actor_kernel, n_action=n_action),
        out_shape=jax.ShapeDtypeStruct((n_action, bp), jnp.float32),
        grid=(steps,),
        in_specs=[
            pl.BlockSpec((n_features, tb), lambda i: (0, i)),  # stream batch lanes
            pl.BlockSpec((h8, n_features), lambda i: (0, 0)),  # VMEM-resident params
            pl.BlockSpec((h8, 1), lambda i: (0, 0)),
            pl.BlockSpec((a8, h8), lambda i: (0, 0)),
            pl.BlockSpec((a8, 1), lambda i: (0, 0)),
        ],
        out_specs=pl.BlockSpec((n_action, tb), lambda i: (0, i)),
        compiler_params=pltpu.CompilerParams(
            dimension_semantics=("parallel",),     # shard batch tiles on v7x
            vmem_limit_bytes=32 * 1024 * 1024,     # v5e scoped default is 16 MiB
        ),
        cost_estimate=cost,
    )(xT, w1t, b1c, w2t, b2c)

    return outT[:, :B].T                           # [B, n_action]


def init_params(key, n_features, n_action, hidden=20):
    """Deterministic init mimicking nn.Linear's uniform(-1/sqrt(fan_in), ...)."""
    k1, k2, k3, k4 = jax.random.split(key, 4)
    bound1 = 1.0 / jnp.sqrt(n_features)
    bound2 = 1.0 / jnp.sqrt(hidden)
    w1 = jax.random.uniform(k1, (n_features, hidden), jnp.float32, -bound1, bound1)
    b1 = jax.random.uniform(k2, (1, hidden), jnp.float32, -bound1, bound1)
    w2 = jax.random.uniform(k3, (hidden, n_action), jnp.float32, -bound2, bound2)
    b2 = jax.random.uniform(k4, (1, n_action), jnp.float32, -bound2, bound2)
    return w1, b1, w2, b2


def reference_forward(x, w1, b1, w2, b2):
    h = jnp.maximum(x @ w1 + b1, 0.0)
    return jax.nn.softmax(h @ w2 + b2, axis=-1)


if __name__ == "__main__":
    # Small shapes consistent with the module (CartPole-like actor).
    batch, n_features, n_action = 8, 4, 2
    key = jax.random.PRNGKey(0)
    kx, kp, kb = jax.random.split(key, 3)
    x = jax.random.normal(kx, (batch, n_features), jnp.float32)
    w1, b1, w2, b2 = init_params(kp, n_features, n_action)

    out = jax.block_until_ready(actor_network_forward(x, w1, b1, w2, b2))
    ref = reference_forward(x, w1, b1, w2, b2)
    assert out.shape == (batch, n_action)
    assert jnp.allclose(out, ref, atol=2e-3, rtol=2e-3), "mismatch vs reference (small)"
    assert jnp.allclose(jnp.sum(out, axis=-1), 1.0, atol=1e-4), "rows must sum to 1"

    # Larger, non-multiple batch exercises the multi-step (even-count) grid.
    big_b = 2050
    xb = jax.random.normal(kb, (big_b, n_features), jnp.float32)
    out_b = jax.block_until_ready(
        actor_network_forward(xb, w1, b1, w2, b2, block_b=512))
    ref_b = reference_forward(xb, w1, b1, w2, b2)
    assert out_b.shape == (big_b, n_action)
    assert jnp.allclose(out_b, ref_b, atol=2e-3, rtol=2e-3), "mismatch vs reference (big)"
    assert jnp.allclose(jnp.sum(out_b, axis=-1), 1.0, atol=1e-4), "rows must sum to 1"

    print("KERNEL_OK")
</pallas_src>

<mosaic_0001>
module attributes {stable_mosaic.version = 11 : i64} {
  func.func @_actor_kernel(%arg0: i32, %arg1: memref<4x128xf32, #tpu.memory_space<vmem>>, %arg2: memref<24x4xf32, #tpu.memory_space<vmem>>, %arg3: memref<24x1xf32, #tpu.memory_space<vmem>>, %arg4: memref<8x24xf32, #tpu.memory_space<vmem>>, %arg5: memref<8x1xf32, #tpu.memory_space<vmem>>, %arg6: memref<2x128xf32, #tpu.memory_space<vmem>>) attributes {dimension_semantics = [#tpu.dimension_semantics<parallel>], iteration_bounds = array<i64: 1>, scalar_prefetch = 0 : i64, scratch_operands = 0 : i64, tpu.core_type = #tpu.core_type<tc>, window_params = [{transform_indices = @transform_0, window_bounds = array<i64: 4, 128>}, {pipeline_mode = #tpu.pipeline_mode<synchronous>, transform_indices = @transform_1, window_bounds = array<i64: 24, 4>}, {pipeline_mode = #tpu.pipeline_mode<synchronous>, transform_indices = @transform_2, window_bounds = array<i64: 24, 1>}, {pipeline_mode = #tpu.pipeline_mode<synchronous>, transform_indices = @transform_3, window_bounds = array<i64: 8, 24>}, {pipeline_mode = #tpu.pipeline_mode<synchronous>, transform_indices = @transform_4, window_bounds = array<i64: 8, 1>}, {transform_indices = @transform_5, window_bounds = array<i64: 2, 128>}]} {
    %c0 = arith.constant 0 : index
    %c0_0 = arith.constant 0 : index
    %0 = vector.load %arg1[%c0, %c0_0] : memref<4x128xf32, #tpu.memory_space<vmem>>, vector<4x128xf32>
    %c0_1 = arith.constant 0 : index
    %c0_2 = arith.constant 0 : index
    %1 = vector.load %arg2[%c0_1, %c0_2] : memref<24x4xf32, #tpu.memory_space<vmem>>, vector<24x4xf32>
    %cst = arith.constant dense<0.000000e+00> : vector<24x128xf32>
    %2 = tpu.matmul %1, %0, %cst {dimension_numbers = #tpu.dot_dimension_numbers<[1], [0], [0], [1], [0, 0, 1, 1], [], []>} : vector<24x4xf32>, vector<4x128xf32>, vector<24x128xf32> -> vector<24x128xf32>
    %c0_3 = arith.constant 0 : index
    %c0_4 = arith.constant 0 : index
    %3 = vector.load %arg3[%c0_3, %c0_4] : memref<24x1xf32, #tpu.memory_space<vmem>>, vector<24x1xf32>
    %4 = vector.broadcast %3 : vector<24x1xf32> to vector<24x128xf32>
    %5 = arith.addf %2, %4 : vector<24x128xf32>
    %cst_5 = arith.constant 0.000000e+00 : f32
    %6 = vector.broadcast %cst_5 : f32 to vector<24x128xf32>
    %7 = arith.maximumf %5, %6 : vector<24x128xf32>
    %c0_6 = arith.constant 0 : index
    %c0_7 = arith.constant 0 : index
    %8 = vector.load %arg4[%c0_6, %c0_7] : memref<8x24xf32, #tpu.memory_space<vmem>>, vector<8x24xf32>
    %cst_8 = arith.constant dense<0.000000e+00> : vector<8x128xf32>
    %9 = tpu.matmul %8, %7, %cst_8 {dimension_numbers = #tpu.dot_dimension_numbers<[1], [0], [0], [1], [0, 0, 1, 1], [], []>} : vector<8x24xf32>, vector<24x128xf32>, vector<8x128xf32> -> vector<8x128xf32>
    %c0_9 = arith.constant 0 : index
    %c0_10 = arith.constant 0 : index
    %10 = vector.load %arg5[%c0_9, %c0_10] : memref<8x1xf32, #tpu.memory_space<vmem>>, vector<8x1xf32>
    %11 = vector.broadcast %10 : vector<8x1xf32> to vector<8x128xf32>
    %12 = arith.addf %9, %11 : vector<8x128xf32>
    %cst_11 = arith.constant dense<0xFF800000> : vector<128xf32>
    %13 = vector.multi_reduction <maximumf>, %12, %cst_11 [0] : vector<8x128xf32> to vector<128xf32>
    %14 = vector.shape_cast %13 : vector<128xf32> to vector<1x128xf32>
    %15 = vector.broadcast %14 : vector<1x128xf32> to vector<8x128xf32>
    %16 = arith.subf %12, %15 : vector<8x128xf32>
    %17 = math.exp %16 : vector<8x128xf32>
    %cst_12 = arith.constant dense<0.000000e+00> : vector<128xf32>
    %18 = vector.multi_reduction <add>, %17, %cst_12 [0] : vector<8x128xf32> to vector<128xf32>
    %19 = vector.shape_cast %18 : vector<128xf32> to vector<1x128xf32>
    %20 = vector.broadcast %19 : vector<1x128xf32> to vector<8x128xf32>
    %21 = arith.divf %17, %20 : vector<8x128xf32>
    %22 = vector.extract_strided_slice %21 {offsets = [0, 0], sizes = [2, 128], strides = [1, 1]} : vector<8x128xf32> to vector<2x128xf32>
    %c0_13 = arith.constant 0 : index
    %c0_14 = arith.constant 0 : index
    %23 = vector.load %arg6[%c0_13, %c0_14] : memref<2x128xf32, #tpu.memory_space<vmem>>, vector<2x128xf32>
    tpu.vector_store %arg6[%c0_13, %c0_14], %22 {strides = array<i32>} : memref<2x128xf32, #tpu.memory_space<vmem>>, vector<2x128xf32>,
    return
  }
  func.func @transform_0(%arg0: i32) -> (i32, i32) {
    %c0_i32 = arith.constant 0 : i32
    %c0_i32_0 = arith.constant 0 : i32
    return %c0_i32, %arg0 : i32, i32
  }
  func.func @transform_1(%arg0: i32) -> (i32, i32) {
    %c0_i32 = arith.constant 0 : i32
    %c0_i32_0 = arith.constant 0 : i32
    %c0_i32_1 = arith.constant 0 : i32
    return %c0_i32, %c0_i32_0 : i32, i32
  }
  func.func @transform_2(%arg0: i32) -> (i32, i32) {
    %c0_i32 = arith.constant 0 : i32
    %c0_i32_0 = arith.constant 0 : i32
    %c0_i32_1 = arith.constant 0 : i32
    return %c0_i32, %c0_i32_0 : i32, i32
  }
  func.func @transform_3(%arg0: i32) -> (i32, i32) {
    %c0_i32 = arith.constant 0 : i32
    %c0_i32_0 = arith.constant 0 : i32
    %c0_i32_1 = arith.constant 0 : i32
    return %c0_i32, %c0_i32_0 : i32, i32
  }
  func.func @transform_4(%arg0: i32) -> (i32, i32) {
    %c0_i32 = arith.constant 0 : i32
    %c0_i32_0 = arith.constant 0 : i32
    %c0_i32_1 = arith.constant 0 : i32
    return %c0_i32, %c0_i32_0 : i32, i32
  }
  func.func @transform_5(%arg0: i32) -> (i32, i32) {
    %c0_i32 = arith.constant 0 : i32
    %c0_i32_0 = arith.constant 0 : i32
    return %c0_i32, %arg0 : i32, i32
  }
}

</mosaic_0001>

<llo_original>
// kernel: tpu_custom_call.1
$region0: #{tpu_custom_call.1}
  #allocation0 [shape = 'u32[]', space=smem, size = 0x4, offset = 0x4, fixed_abs, tag = 'smem constant byte address 0x4 - core index']
  #allocation1 [shape = 'u32[144,128]{1,0:T(1,128)}', space=vmem, size = 0x12000, scoped, tag = 'internal scratch']
  %s0 = inlined_call_operand.vmem [shape: f32[4,128], index: 0, kind: input, shape index: {}]
  %s1 = inlined_call_operand.vmem [shape: f32[24,4], index: 1, kind: input, shape index: {}]
  %s2 = inlined_call_operand.vmem [shape: f32[24,1], index: 2, kind: input, shape index: {}]
  %s3 = inlined_call_operand.vmem [shape: f32[8,24], index: 3, kind: input, shape index: {}]
  %s4 = inlined_call_operand.vmem [shape: f32[8,1], index: 4, kind: input, shape index: {}]
  %s5 = inlined_call_operand.hbm [shape: f32[2,128], index: 5, kind: output, shape index: {}]
  %s6 = sld [smem:[#allocation0]]
  $region30: #{tpu_custom_call.1} parent=0
    _
  %s8 = ssub.s32 1, %s6
  %s9 = scalar_select 0, %s8, %s6
  $region1: #{tpu_custom_call.1} parent=0
    #allocation2 [shape = 'u8[1024]{0}', space=vmem, size = 0x400, scoped, tag = 'output window, operand 0, single buffered']
    #allocation3 [shape = 's32[1]{0}', space=sflag, size = 0x4, scoped, tag = 'scoped memory for tpu_custom_call.1']
    %10 = vsyncpa [#allocation3], 0
    // Predicated region
    $region2: #{tpu_custom_call.1} parent=1 // pred_check
      _
    $region3: #{tpu_custom_call.1} parent=1 // pred_check_branch
      %12 = sbr.rel (0) target = $region5
    $region4: #{tpu_custom_call.1} parent=1 // pred_region
      _
    $region5: #{tpu_custom_call.1} parent=1 // pred_fallthru
      _
    // Predicated region
    $region6: #{tpu_custom_call.1} parent=1 // pred_check
      _
    $region7: #{tpu_custom_call.1} parent=1 // pred_check_branch
      %14 = sbr.rel (0) target = $region9
    $region8: #{tpu_custom_call.1} parent=1 // pred_region
      _
    $region9: #{tpu_custom_call.1} parent=1 // pred_fallthru
      _
    // Predicated region
    $region10: #{tpu_custom_call.1} parent=1 // pred_check
      _
    $region11: #{tpu_custom_call.1} parent=1 // pred_check_branch
      %16 = sbr.rel (0) target = $region13
    $region12: #{tpu_custom_call.1} parent=1 // pred_region
      _
    $region13: #{tpu_custom_call.1} parent=1 // pred_fallthru
      _
    // Predicated region
    $region14: #{tpu_custom_call.1} parent=1 // pred_check
      _
    $region15: #{tpu_custom_call.1} parent=1 // pred_check_branch
      %18 = sbr.rel (0) target = $region17
    $region16: #{tpu_custom_call.1} parent=1 // pred_region
      _
    $region17: #{tpu_custom_call.1} parent=1 // pred_fallthru
      _
    // Predicated region
    $region18: #{tpu_custom_call.1} parent=1 // pred_check
      _
    $region19: #{tpu_custom_call.1} parent=1 // pred_check_branch
      %20 = sbr.rel (0) target = $region21
    $region20: #{tpu_custom_call.1} parent=1 // pred_region
      _
    $region21: #{tpu_custom_call.1} parent=1 // pred_fallthru
      _
    %v21 = vld [vmem:[%s0] sm:$0xf]
    %v22 = vld [vmem:[%s1] sm:$0xff]
    %v23 = vld [vmem:[%s1 + $0x8] sm:$0xff]
    %v24 = vld [vmem:[%s1 + $0x10] sm:$0xff]
    %v25 = vld [vmem:[%s2] sm:$0xff]
    %v26 = vld [vmem:[%s2 + $0x8] sm:$0xff]
    %v27 = vld [vmem:[%s2 + $0x10] sm:$0xff]
    %29 = vset.pattern.permute.xlu0 0
    %30 = vperm.xlu0 %29, %v25
    %v31 = vpop.permute.xlu0 %30
    %34 = vset.pattern.permute.xlu0 0
    %35 = vperm.xlu0 %34, %v26
    %v36 = vpop.permute.xlu0 %35
    %39 = vset.pattern.permute.xlu0 0
    %40 = vperm.xlu0 %39, %v27
    %v41 = vpop.permute.xlu0 %40
    %vm43 = vcmask 31744
    %v45 = vsel %vm43, %v22, 0
    %v48 = vsel %vm43, %v23, 0
    %v51 = vsel %vm43, %v24, 0
    %vm53 = vcmask 1043456
    %v55 = vsel %vm53, %v21, 0
    %57 = vmatprep.subr.mxu0 0.0
    %58 = vmatpush1.msra.mxu0 0.0
    %59 = vmatprep.subr.mxu0 0.0
    %60 = vmatpush1.msra.mxu0 0.0
    %61 = vmatprep.subr.mxu0 0.0
    %62 = vmatpush1.msra.mxu0 0.0
    %63 = vmatprep.subr.mxu0 0.0
    %64 = vmatpush1.msra.mxu0 0.0
    %65 = vmatprep.subr.mxu0 0.0
    %66 = vmatpush1.msra.mxu0 0.0
    %67 = vmatprep.subr.mxu0 0.0
    %68 = vmatpush1.msra.mxu0 0.0
    %69 = vmatprep.subr.mxu0 0.0
    %70 = vmatpush1.msra.mxu0 0.0
    %71 = vmatprep.subr.mxu0 0.0
    %72 = vmatpush1.msra.mxu0 0.0
    %73 = vmatprep.subr.mxu0 0.0
    %74 = vmatpush1.msra.mxu0 0.0
    %75 = vmatprep.subr.mxu0 0.0
    %76 = vmatpush1.msra.mxu0 0.0
    %77 = vmatprep.subr.mxu0 0.0
    %78 = vmatpush1.msra.mxu0 0.0
    %79 = vmatprep.subr.mxu0 0.0
    %80 = vmatpush1.msra.mxu0 0.0
    %81 = vmatprep.subr.mxu0 0.0
    %82 = vmatpush1.msra.mxu0 0.0
    %83 = vmatprep.subr.mxu0 0.0
    %84 = vmatpush1.msra.mxu0 0.0
    %85 = vmatprep.subr.mxu0 0.0
    %86 = vmatpush1.msra.mxu0 0.0
    %87 = vmatprep.subr.mxu0 0.0
    %88 = vmatpush1.msra.mxu0 %v55
    %89 = vmatprep.subr.mxu0 0.0
    %90 = vmatpush2.msra.mxu0 0.0
    %91 = vmatprep.subr.mxu0 0.0
    %92 = vmatpush2.msra.mxu0 0.0
    %93 = vmatprep.subr.mxu0 0.0
    %94 = vmatpush2.msra.mxu0 0.0
    %95 = vmatprep.subr.mxu0 0.0
    %96 = vmatpush2.msra.mxu0 0.0
    %97 = vmatprep.subr.mxu0 0.0
    %98 = vmatpush2.msra.mxu0 0.0
    %99 = vmatprep.subr.mxu0 0.0
    %100 = vmatpush2.msra.mxu0 0.0
    %101 = vmatprep.subr.mxu0 0.0
    %102 = vmatpush2.msra.mxu0 0.0
    %103 = vmatprep.subr.mxu0 0.0
    %104 = vmatpush2.msra.mxu0 0.0
    %105 = vmatprep.subr.mxu0 0.0
    %106 = vmatpush2.msra.mxu0 0.0
    %107 = vmatprep.subr.mxu0 0.0
    %108 = vmatpush2.msra.mxu0 0.0
    %109 = vmatprep.subr.mxu0 0.0
    %110 = vmatpush2.msra.mxu0 0.0
    %111 = vmatprep.subr.mxu0 0.0
    %112 = vmatpush2.msra.mxu0 0.0
    %113 = vmatprep.subr.mxu0 0.0
    %114 = vmatpush2.msra.mxu0 0.0
    %115 = vmatprep.subr.mxu0 0.0
    %116 = vmatpush2.msra.mxu0 0.0
    %117 = vmatprep.subr.mxu0 0.0
    %118 = vmatpush2.msra.mxu0 0.0
    %119 = vmatprep.subr.mxu0 0.0
    %120 = vmatpush2.msra.mxu0 0.0
    %121 = vmatprep.mubr.f32.mxu0 0.0
    %122 = vmatmul.mubr.f32.gmra.mxu0 %v45
    %v123 = vpop.f32.mrf.mxu0
    %v124 = vadd.f32 %v31, %v123
    %v125 = vpop.f32.mrf.mxu0
    %126 = vmatprep.mubr.f32.mxu0 0.0
    %127 = vmatmul.mubr.f32.gmra.mxu0 %v48
    %v128 = vpop.f32.mrf.mxu0
    %v129 = vadd.f32 %v36, %v128
    %v130 = vpop.f32.mrf.mxu0
    %131 = vmatprep.mubr.f32.mxu0 0.0
    %132 = vmatmul.mubr.f32.gmra.mxu0 %v51
    %v133 = vpop.f32.mrf.mxu0
    %v134 = vadd.f32 %v41, %v133
    %v135 = vpop.f32.mrf.mxu0
    %136 = vdwg.mxu0
    %v137 = vmax.f32 %v124, 0.0
    %v138 = vmax.f32 %v129, 0.0
    %v139 = vmax.f32 %v134, 0.0
    %v140 = vld [vmem:[%s3] sm:$0xff]
    %v141 = vld [vmem:[%s4] sm:$0xff]
    %143 = vset.pattern.permute.xlu0 0
    %144 = vperm.xlu0 %143, %v141
    %v145 = vpop.permute.xlu0 %144
    %vm147 = vcmask 195584
    %v149 = vsel %vm147, %v140, 0
    %151 = vmatprep.subr.mxu0 0.0
    %152 = vmatpush1.msra.mxu0 0.0
    %153 = vmatprep.subr.mxu0 0.0
    %154 = vmatpush1.msra.mxu0 0.0
    %155 = vmatprep.subr.mxu0 0.0
    %156 = vmatpush1.msra.mxu0 0.0
    %157 = vmatprep.subr.mxu0 0.0
    %158 = vmatpush1.msra.mxu0 0.0
    %159 = vmatprep.subr.mxu0 0.0
    %160 = vmatpush1.msra.mxu0 0.0
    %161 = vmatprep.subr.mxu0 0.0
    %162 = vmatpush1.msra.mxu0 0.0
    %163 = vmatprep.subr.mxu0 0.0
    %164 = vmatpush1.msra.mxu0 0.0
    %165 = vmatprep.subr.mxu0 0.0
    %166 = vmatpush1.msra.mxu0 0.0
    %167 = vmatprep.subr.mxu0 0.0
    %168 = vmatpush1.msra.mxu0 0.0
    %169 = vmatprep.subr.mxu0 0.0
    %170 = vmatpush1.msra.mxu0 0.0
    %171 = vmatprep.subr.mxu0 0.0
    %172 = vmatpush1.msra.mxu0 0.0
    %173 = vmatprep.subr.mxu0 0.0
    %174 = vmatpush1.msra.mxu0 0.0
    %175 = vmatprep.subr.mxu0 0.0
    %176 = vmatpush1.msra.mxu0 0.0
    %177 = vmatprep.subr.mxu0 0.0
    %178 = vmatpush1.msra.mxu0 %v139
    %179 = vmatprep.subr.mxu0 0.0
    %180 = vmatpush1.msra.mxu0 %v138
    %181 = vmatprep.subr.mxu0 0.0
    %182 = vmatpush1.msra.mxu0 %v137
    %183 = vmatprep.subr.mxu0 0.0
    %184 = vmatpush2.msra.mxu0 0.0
    %185 = vmatprep.subr.mxu0 0.0
    %186 = vmatpush2.msra.mxu0 0.0
    %187 = vmatprep.subr.mxu0 0.0
    %188 = vmatpush2.msra.mxu0 0.0
    %189 = vmatprep.subr.mxu0 0.0
    %190 = vmatpush2.msra.mxu0 0.0
    %191 = vmatprep.subr.mxu0 0.0
    %192 = vmatpush2.msra.mxu0 0.0
    %193 = vmatprep.subr.mxu0 0.0
    %194 = vmatpush2.msra.mxu0 0.0
    %195 = vmatprep.subr.mxu0 0.0
    %196 = vmatpush2.msra.mxu0 0.0
    %197 = vmatprep.subr.mxu0 0.0
    %198 = vmatpush2.msra.mxu0 0.0
    %199 = vmatprep.subr.mxu0 0.0
    %200 = vmatpush2.msra.mxu0 0.0
    %201 = vmatprep.subr.mxu0 0.0
    %202 = vmatpush2.msra.mxu0 0.0
    %203 = vmatprep.subr.mxu0 0.0
    %204 = vmatpush2.msra.mxu0 0.0
    %205 = vmatprep.subr.mxu0 0.0
    %206 = vmatpush2.msra.mxu0 0.0
    %207 = vmatprep.subr.mxu0 0.0
    %208 = vmatpush2.msra.mxu0 0.0
    %209 = vmatprep.subr.mxu0 0.0
    %210 = vmatpush2.msra.mxu0 0.0
    %211 = vmatprep.subr.mxu0 0.0
    %212 = vmatpush2.msra.mxu0 0.0
    %213 = vmatprep.subr.mxu0 0.0
    %214 = vmatpush2.msra.mxu0 0.0
    %215 = vmatprep.mubr.f32.mxu0 0.0
    %216 = vmatmul.mubr.f32.gmra.mxu0 %v149
    %v217 = vpop.f32.mrf.mxu0
    %v218 = vadd.f32 %v145, %v217
    %v219 = vpop.f32.mrf.mxu0
    %220 = vdwg.mxu0
    %v221 = vrot.slane %v218, 4
    %v222 = vmax.f32 %v218, %v221
    %v223 = vrot.slane %v222, 2
    %v224 = vmax.f32 %v222, %v223
    %v225 = vrot.slane %v224, 1
    %v226 = vmax.f32 %v224, %v225
    %v227 = vsub.f32 %v218, %v226
    %v228 = vmul.f32 %v227, 1.442695
    %v229 = vpow.pop %v228
    %v230 = vrot.slane %v229, 4
    %v231 = vadd.f32 %v229, %v230
    %v232 = vrot.slane %v231, 2
    %v233 = vadd.f32 %v231, %v232
    %v234 = vrot.slane %v233, 1
    %v235 = vadd.f32 %v233, %v234
    %v236 = vrcp.pop %v235
    %v237 = vmul.f32 %v229, %v236
    %238 = vst [vmem:[#allocation2] sm:$0x3] %v237
    // Predicated region
    $region22: #{tpu_custom_call.1} parent=1 // pred_check
      _
    $region23: #{tpu_custom_call.1} parent=1 // pred_check_branch
      %240 = sbr.rel (0) target = $region25
    $region24: #{tpu_custom_call.1} parent=1 // pred_region
      %s242 = ssub.s32 32, 32
      %243 = vsyncadd [#allocation3], %s242
      %s245 = sshll.u32 [#allocation2], 4
      %s246 = int_to_ptr.vmem [resolvable:$true] %s245
      %248 = dma.vmem_to_hbm [thread:$0]  %s246, 32, %s5, [#allocation3]
    $region25: #{tpu_custom_call.1} parent=1 // pred_fallthru
      _
    // Predicated region
    $region26: #{tpu_custom_call.1} parent=1 // pred_check
      _
    $region27: #{tpu_custom_call.1} parent=1 // pred_check_branch
      %250 = sbr.rel (0) target = $region29
    $region28: #{tpu_custom_call.1} parent=1 // pred_region
      %251 = dma.done [#allocation3], 32
    $region29: #{tpu_custom_call.1} parent=1 // pred_fallthru
      _
    %252 = vsyncpa [#allocation3], 1

</llo_original>
